<compile_context>
chip_gen: v5e
topology: v5e:2x2
jax: 0.10.0
libtpu: 0.0.40
codegen_flags: <defaults>
</compile_context>

<pallas_src>
import functools

import jax
import jax.numpy as jnp
from jax.experimental import pallas as pl
from jax.experimental.pallas import tpu as pltpu


def _round_up(x, m):
    return ((x + m - 1) // m) * m


def _bn_train(h, gamma, beta, eps):
    """Training-mode BatchNorm1d (biased variance) with per-instance statistics.

    h: (Nt, B, F) f32; gamma/beta: (1, F) f32 (broadcast over instances/batch).
    Two-pass (mean, then centered second moment) for numerical safety.
    rsqrt goes to the EUP slot; the apply is a sub + multiply-add on the VPU.
    """
    inv_b = 1.0 / h.shape[1]
    mu = jnp.sum(h, axis=1, keepdims=True) * inv_b          # (Nt, 1, F)
    d = h - mu
    var = jnp.sum(d * d, axis=1, keepdims=True) * inv_b     # biased variance
    return d * (gamma * jax.lax.rsqrt(var + eps)) + beta


def resnet_block_kernel(x_ref, w1_ref, wm_ref, bn_ref, o_ref, *, eps):
    # x_ref : (Nt, B, F_in_p)    bf16   Nt independent instances per grid step
    # w1_ref: (F_in_p, F_out_p)  bf16   first_linear weight, pre-transposed
    # wm_ref: (F_out_p, F_out_p) bf16   mid Linear weight, pre-transposed
    # bn_ref: (6, F_out_p)       f32    rows = [g1, b1, g2, b2, g3, b3]
    # o_ref : (Nt, B, F_out_p)
    nt, b, f_in = x_ref.shape
    f_out = w1_ref.shape[1]
    m = nt * b

    bn = bn_ref[...]
    g1, be1 = bn[0:1, :], bn[1:2, :]
    g2, be2 = bn[2:3, :], bn[3:4, :]
    g3, be3 = bn[4:5, :], bn[5:6, :]

    # first_linear: all instances share W, so flatten (Nt, B) -> M to fill the
    # MXU rows.  Its bias is cancelled exactly by the training-mode BatchNorms
    # (BN1 directly; BN3 via the residual) and is not passed in.
    x2d = x_ref[...].reshape(m, f_in)
    x1 = jnp.dot(x2d, w1_ref[...], preferred_element_type=jnp.float32)  # (M, F) f32
    x1_3d = x1.reshape(nt, b, f_out)

    # sequential: BN1 -> ReLU -> Linear_mid -> BN2 -> ReLU
    h = jnp.maximum(_bn_train(x1_3d, g1, be1, eps), 0.0)
    h = jnp.dot(h.reshape(m, f_out).astype(jnp.bfloat16), wm_ref[...],
                preferred_element_type=jnp.float32)
    h = jnp.maximum(_bn_train(h.reshape(nt, b, f_out), g2, be2, eps), 0.0)

    # residual add, then output_seq: BN3
    x2 = h + x1_3d
    o_ref[...] = _bn_train(x2, g3, be3, eps).astype(o_ref.dtype)


def pack_params(params, num_in_feats):
    """Pad/cast the weights and pack the BN vectors ONCE (hoisted out of the
    forward path; these were per-call XLA ops before)."""
    f_out = params["w1_t"].shape[1]
    f_in_p = _round_up(num_in_feats, 128)    # minimal lane padding only
    f_out_p = _round_up(f_out, 128)
    w1 = jnp.pad(params["w1_t"].astype(jnp.bfloat16),
                 ((0, f_in_p - num_in_feats), (0, f_out_p - f_out)))
    wm = jnp.pad(params["wm_t"].astype(jnp.bfloat16),
                 ((0, f_out_p - f_out), (0, f_out_p - f_out)))
    bn = jnp.stack([params["gamma1"], params["beta1"],
                    params["gamma2"], params["beta2"],
                    params["gamma3"], params["beta3"]], axis=0).astype(jnp.float32)
    # Invariant: padded gamma/beta columns are ZERO so padded feature columns
    # stay exactly zero through the whole block (scale=0, shift=0 there).
    bn = jnp.pad(bn, ((0, 0), (0, f_out_p - f_out)))
    return {"w1_p": w1, "wm_p": wm, "bn_p": bn,
            "f_in": num_in_feats, "f_out": f_out,
            "f_in_p": f_in_p, "f_out_p": f_out_p}


def _choose_nt(n, b):
    """Instance-merge factor: target M = Nt*B ~ 128 (fills MXU rows, keeps the
    live f32 state x1/h/x2 ~48 vregs at F=128); when N > 1, keep at least two
    grid steps so v7x's second TensorCore is fed (inert on v5e/v6e)."""
    target_m = 128
    nt = max(1, min(n, max(1, target_m // max(b, 1))))
    if n > 1 and pl.cdiv(n, nt) < 2:
        nt = pl.cdiv(n, 2)
    return nt


def resnet_block_forward(x, packed, *, eps=1e-5, out_dtype=jnp.float32):
    """ResNetBlock forward (training-mode BatchNorm, batch statistics).

    x: (B, F_in) or (N, B, F_in). Each instance n gets its own BatchNorm batch
       statistics (identical to N independent module calls).
    packed: dict from pack_params (padded bf16 weights + packed BN vectors).
    out_dtype: jnp.bfloat16 halves output writeback bytes if the consumer allows.
    """
    squeeze = x.ndim == 2
    if squeeze:
        x = x[None]
    n, b, f_in = x.shape
    assert f_in == packed["f_in"]
    f_in_p, f_out_p, f_out = packed["f_in_p"], packed["f_out_p"], packed["f_out"]

    nt = _choose_nt(n, b)
    grid_n = pl.cdiv(n, nt)
    n_pad = grid_n * nt

    # Lane-dense zero padding of the activations; padded feature columns stay
    # exactly zero and padded instances compute harmless (finite) values that
    # are sliced off below.
    xb = jnp.pad(x.astype(jnp.bfloat16),
                 ((0, n_pad - n), (0, 0), (0, f_in_p - f_in)))

    # VMEM budget: double-buffered blocks + live f32 intermediates, 4x headroom,
    # capped at ~75% of physical VMEM (v7x only has 64 MiB; leave Mosaic scratch room).
    m = nt * b
    out_bytes = jnp.dtype(out_dtype).itemsize
    est = (2 * m * f_in_p * 2              # x blocks (bf16, double-buffered)
           + 2 * m * f_out_p * out_bytes   # out blocks
           + 2 * f_in_p * f_out_p * 2      # w1
           + 2 * f_out_p * f_out_p * 2     # wm
           + 2 * 6 * f_out_p * 4           # packed BN vectors
           + 6 * m * f_out_p * 4)          # live f32 intermediates (x1, h, x2, temps)
    try:
        hard_cap = int(pltpu.get_tpu_info().vmem_capacity_bytes * 3 // 4)
    except Exception:
        hard_cap = 48 * 1024 * 1024        # safe on v7x (64 MiB physical) and older
    vmem_limit = int(min(max(4 * est, 16 * 1024 * 1024), hard_cap))

    out = pl.pallas_call(
        functools.partial(resnet_block_kernel, eps=eps),
        out_shape=jax.ShapeDtypeStruct((n_pad, b, f_out_p), out_dtype),
        grid=(grid_n,),
        in_specs=[
            pl.BlockSpec((nt, b, f_in_p), lambda i: (i, 0, 0)),
            pl.BlockSpec((f_in_p, f_out_p), lambda i: (0, 0)),
            pl.BlockSpec((f_out_p, f_out_p), lambda i: (0, 0)),
            pl.BlockSpec((6, f_out_p), lambda i: (0, 0)),
        ],
        out_specs=pl.BlockSpec((nt, b, f_out_p), lambda i: (i, 0, 0)),
        compiler_params=pltpu.CompilerParams(
            dimension_semantics=("parallel",),
            vmem_limit_bytes=vmem_limit,
        ),
    )(xb, packed["w1_p"], packed["wm_p"], packed["bn_p"])

    # Slice padding only when it was actually added (avoids an extra XLA copy
    # when N and F_out are already aligned).
    if n_pad != n or f_out_p != f_out:
        out = out[:n, :, :f_out]
    return out[0] if squeeze else out


def resnet_block_reference(x, params, eps=1e-5):
    """Pure-JAX reference with full PyTorch semantics (biases included), using
    the same bf16 matmul operands as the kernel so the comparison only sees
    bf16/accumulation rounding noise."""
    def bn(h, g, b):
        mu = jnp.mean(h, axis=0, keepdims=True)
        var = jnp.mean((h - mu) ** 2, axis=0, keepdims=True)
        return (h - mu) * jax.lax.rsqrt(var + eps) * g + b

    w1 = params["w1_t"].astype(jnp.bfloat16)
    wm = params["wm_t"].astype(jnp.bfloat16)
    x1 = jnp.dot(x.astype(jnp.bfloat16), w1,
                 preferred_element_type=jnp.float32) + params["b1"]
    h = jnp.maximum(bn(x1, params["gamma1"], params["beta1"]), 0.0)
    h = jnp.dot(h.astype(jnp.bfloat16), wm,
                preferred_element_type=jnp.float32) + params["bm"]
    h = jnp.maximum(bn(h, params["gamma2"], params["beta2"]), 0.0)
    x2 = h + x1
    return bn(x2, params["gamma3"], params["beta3"])


def init_params(key, num_in_feats, num_out_feats):
    """Parameter shapes/init mirroring the PyTorch module.

    * first_linear keeps PyTorch's default init (init_parameters() only
      xavier-inits the Linear inside `sequential`).
    * Linear biases use PyTorch's default U(-1/sqrt(fan_in), 1/sqrt(fan_in));
      they are returned for the reference but NOT consumed by the kernel
      (cancelled exactly by the following training-mode BatchNorms).
    * BatchNorm: gamma=1, beta=0.
    Weights are stored pre-transposed as (F_in, F_out) so the kernel does x @ W.
    """
    k1, k2, k3, k4 = jax.random.split(key, 4)

    bound1 = 1.0 / float(num_in_feats) ** 0.5
    w1 = jax.random.uniform(k1, (num_out_feats, num_in_feats),
                            minval=-bound1, maxval=bound1, dtype=jnp.float32)
    b1 = jax.random.uniform(k2, (num_out_feats,),
                            minval=-bound1, maxval=bound1, dtype=jnp.float32)

    xav = (6.0 / float(num_out_feats + num_out_feats)) ** 0.5
    wm = jax.random.uniform(k3, (num_out_feats, num_out_feats),
                            minval=-xav, maxval=xav, dtype=jnp.float32)
    boundm = 1.0 / float(num_out_feats) ** 0.5
    bm = jax.random.uniform(k4, (num_out_feats,),
                            minval=-boundm, maxval=boundm, dtype=jnp.float32)

    ones = jnp.ones((num_out_feats,), jnp.float32)
    zeros = jnp.zeros((num_out_feats,), jnp.float32)
    return {
        "w1_t": w1.T, "b1": b1,
        "wm_t": wm.T, "bm": bm,
        "gamma1": ones, "beta1": zeros,
        "gamma2": ones, "beta2": zeros,
        "gamma3": ones, "beta3": zeros,
    }


if __name__ == "__main__":
    key = jax.random.PRNGKey(0)
    k_x, k_p, k_x2 = jax.random.split(key, 3)

    N, B, F_IN, F_OUT = 4, 8, 16, 32
    x = jax.random.normal(k_x, (N, B, F_IN), dtype=jnp.float32)
    params = init_params(k_p, F_IN, F_OUT)
    packed = pack_params(params, F_IN)   # weight pad/cast + BN packing hoisted once

    # Instance-merged path (Nt instances per grid step, per-instance BN stats).
    out = jax.block_until_ready(resnet_block_forward(x, packed))
    assert out.shape == (N, B, F_OUT) and out.dtype == jnp.float32
    ref = jax.vmap(lambda xi: resnet_block_reference(xi, params))(x)
    err = float(jnp.max(jnp.abs(out - ref)))
    assert err < 5e-2, f"max abs err vs reference: {err}"

    # N not divisible by Nt -> exercises instance padding + >=2 grid steps.
    N2 = 5
    x2 = jax.random.normal(k_x2, (N2, B, F_IN), dtype=jnp.float32)
    out2 = jax.block_until_ready(resnet_block_forward(x2, packed))
    assert out2.shape == (N2, B, F_OUT)
    ref2 = jax.vmap(lambda xi: resnet_block_reference(xi, params))(x2)
    err2 = float(jnp.max(jnp.abs(out2 - ref2)))
    assert err2 < 5e-2, f"max abs err vs reference (padded N): {err2}"

    # Single-instance 2-D input path with bf16 output (reduced writeback).
    out2d = jax.block_until_ready(
        resnet_block_forward(x[0], packed, out_dtype=jnp.bfloat16))
    assert out2d.shape == (B, F_OUT) and out2d.dtype == jnp.bfloat16

    print("KERNEL_OK")
</pallas_src>

<mosaic_0001>
module attributes {stable_mosaic.version = 11 : i64} {
  func.func @resnet_block_kernel(%arg0: i32, %arg1: memref<2x8x128xbf16, #tpu.memory_space<vmem>>, %arg2: memref<128x128xbf16, #tpu.memory_space<vmem>>, %arg3: memref<128x128xbf16, #tpu.memory_space<vmem>>, %arg4: memref<6x128xf32, #tpu.memory_space<vmem>>, %arg5: memref<2x8x128xf32, #tpu.memory_space<vmem>>) attributes {dimension_semantics = [#tpu.dimension_semantics<parallel>], iteration_bounds = array<i64: 2>, scalar_prefetch = 0 : i64, scratch_operands = 0 : i64, tpu.core_type = #tpu.core_type<tc>, window_params = [{transform_indices = @transform_0, window_bounds = array<i64: 2, 8, 128>}, {pipeline_mode = #tpu.pipeline_mode<synchronous>, transform_indices = @transform_1, window_bounds = array<i64: 128, 128>}, {pipeline_mode = #tpu.pipeline_mode<synchronous>, transform_indices = @transform_2, window_bounds = array<i64: 128, 128>}, {pipeline_mode = #tpu.pipeline_mode<synchronous>, transform_indices = @transform_3, window_bounds = array<i64: 6, 128>}, {transform_indices = @transform_4, window_bounds = array<i64: 2, 8, 128>}]} {
    %c0 = arith.constant 0 : index
    %c0_0 = arith.constant 0 : index
    %0 = vector.load %arg4[%c0, %c0_0] : memref<6x128xf32, #tpu.memory_space<vmem>>, vector<6x128xf32>
    %1 = vector.extract_strided_slice %0 {offsets = [0, 0], sizes = [1, 128], strides = [1, 1]} : vector<6x128xf32> to vector<1x128xf32>
    %2 = vector.extract_strided_slice %0 {offsets = [1, 0], sizes = [1, 128], strides = [1, 1]} : vector<6x128xf32> to vector<1x128xf32>
    %3 = vector.extract_strided_slice %0 {offsets = [2, 0], sizes = [1, 128], strides = [1, 1]} : vector<6x128xf32> to vector<1x128xf32>
    %4 = vector.extract_strided_slice %0 {offsets = [3, 0], sizes = [1, 128], strides = [1, 1]} : vector<6x128xf32> to vector<1x128xf32>
    %5 = vector.extract_strided_slice %0 {offsets = [4, 0], sizes = [1, 128], strides = [1, 1]} : vector<6x128xf32> to vector<1x128xf32>
    %6 = vector.extract_strided_slice %0 {offsets = [5, 0], sizes = [1, 128], strides = [1, 1]} : vector<6x128xf32> to vector<1x128xf32>
    %c0_1 = arith.constant 0 : index
    %c0_2 = arith.constant 0 : index
    %c0_3 = arith.constant 0 : index
    %7 = vector.load %arg1[%c0_1, %c0_2, %c0_3] : memref<2x8x128xbf16, #tpu.memory_space<vmem>>, vector<2x8x128xbf16>
    %8 = vector.shape_cast %7 : vector<2x8x128xbf16> to vector<16x128xbf16>
    %c0_4 = arith.constant 0 : index
    %c0_5 = arith.constant 0 : index
    %9 = vector.load %arg2[%c0_4, %c0_5] : memref<128x128xbf16, #tpu.memory_space<vmem>>, vector<128x128xbf16>
    %cst = arith.constant dense<0.000000e+00> : vector<16x128xf32>
    %10 = tpu.matmul %8, %9, %cst {dimension_numbers = #tpu.dot_dimension_numbers<[1], [0], [0], [1], [0, 0, 1, 1], [], []>} : vector<16x128xbf16>, vector<128x128xbf16>, vector<16x128xf32> -> vector<16x128xf32>
    %11 = vector.shape_cast %10 : vector<16x128xf32> to vector<2x8x128xf32>
    %cst_6 = arith.constant dense<0.000000e+00> : vector<2x128xf32>
    %12 = vector.multi_reduction <add>, %11, %cst_6 [1] : vector<2x8x128xf32> to vector<2x128xf32>
    %13 = vector.shape_cast %12 : vector<2x128xf32> to vector<2x1x128xf32>
    %cst_7 = arith.constant 1.250000e-01 : f32
    %14 = vector.broadcast %cst_7 : f32 to vector<2x1x128xf32>
    %15 = arith.mulf %13, %14 : vector<2x1x128xf32>
    %16 = vector.broadcast %15 : vector<2x1x128xf32> to vector<2x8x128xf32>
    %17 = arith.subf %11, %16 : vector<2x8x128xf32>
    %18 = arith.mulf %17, %17 : vector<2x8x128xf32>
    %cst_8 = arith.constant dense<0.000000e+00> : vector<2x128xf32>
    %19 = vector.multi_reduction <add>, %18, %cst_8 [1] : vector<2x8x128xf32> to vector<2x128xf32>
    %20 = vector.shape_cast %19 : vector<2x128xf32> to vector<2x1x128xf32>
    %cst_9 = arith.constant 1.250000e-01 : f32
    %21 = vector.broadcast %cst_9 : f32 to vector<2x1x128xf32>
    %22 = arith.mulf %20, %21 : vector<2x1x128xf32>
    %cst_10 = arith.constant 9.99999974E-6 : f32
    %23 = vector.broadcast %cst_10 : f32 to vector<2x1x128xf32>
    %24 = arith.addf %22, %23 : vector<2x1x128xf32>
    %25 = math.rsqrt %24 : vector<2x1x128xf32>
    %26 = vector.shape_cast %1 : vector<1x128xf32> to vector<1x1x128xf32>
    %27 = vector.broadcast %26 : vector<1x1x128xf32> to vector<2x1x128xf32>
    %28 = arith.mulf %27, %25 : vector<2x1x128xf32>
    %29 = vector.broadcast %28 : vector<2x1x128xf32> to vector<2x8x128xf32>
    %30 = arith.mulf %17, %29 : vector<2x8x128xf32>
    %31 = vector.shape_cast %2 : vector<1x128xf32> to vector<1x1x128xf32>
    %32 = vector.broadcast %31 : vector<1x1x128xf32> to vector<2x8x128xf32>
    %33 = arith.addf %30, %32 : vector<2x8x128xf32>
    %cst_11 = arith.constant 0.000000e+00 : f32
    %34 = vector.broadcast %cst_11 : f32 to vector<2x8x128xf32>
    %35 = arith.maximumf %33, %34 : vector<2x8x128xf32>
    %36 = vector.shape_cast %35 : vector<2x8x128xf32> to vector<16x128xf32>
    %37 = arith.truncf %36 : vector<16x128xf32> to vector<16x128xbf16>
    %c0_12 = arith.constant 0 : index
    %c0_13 = arith.constant 0 : index
    %38 = vector.load %arg3[%c0_12, %c0_13] : memref<128x128xbf16, #tpu.memory_space<vmem>>, vector<128x128xbf16>
    %cst_14 = arith.constant dense<0.000000e+00> : vector<16x128xf32>
    %39 = tpu.matmul %37, %38, %cst_14 {dimension_numbers = #tpu.dot_dimension_numbers<[1], [0], [0], [1], [0, 0, 1, 1], [], []>} : vector<16x128xbf16>, vector<128x128xbf16>, vector<16x128xf32> -> vector<16x128xf32>
    %40 = vector.shape_cast %39 : vector<16x128xf32> to vector<2x8x128xf32>
    %cst_15 = arith.constant dense<0.000000e+00> : vector<2x128xf32>
    %41 = vector.multi_reduction <add>, %40, %cst_15 [1] : vector<2x8x128xf32> to vector<2x128xf32>
    %42 = vector.shape_cast %41 : vector<2x128xf32> to vector<2x1x128xf32>
    %cst_16 = arith.constant 1.250000e-01 : f32
    %43 = vector.broadcast %cst_16 : f32 to vector<2x1x128xf32>
    %44 = arith.mulf %42, %43 : vector<2x1x128xf32>
    %45 = vector.broadcast %44 : vector<2x1x128xf32> to vector<2x8x128xf32>
    %46 = arith.subf %40, %45 : vector<2x8x128xf32>
    %47 = arith.mulf %46, %46 : vector<2x8x128xf32>
    %cst_17 = arith.constant dense<0.000000e+00> : vector<2x128xf32>
    %48 = vector.multi_reduction <add>, %47, %cst_17 [1] : vector<2x8x128xf32> to vector<2x128xf32>
    %49 = vector.shape_cast %48 : vector<2x128xf32> to vector<2x1x128xf32>
    %cst_18 = arith.constant 1.250000e-01 : f32
    %50 = vector.broadcast %cst_18 : f32 to vector<2x1x128xf32>
    %51 = arith.mulf %49, %50 : vector<2x1x128xf32>
    %cst_19 = arith.constant 9.99999974E-6 : f32
    %52 = vector.broadcast %cst_19 : f32 to vector<2x1x128xf32>
    %53 = arith.addf %51, %52 : vector<2x1x128xf32>
    %54 = math.rsqrt %53 : vector<2x1x128xf32>
    %55 = vector.shape_cast %3 : vector<1x128xf32> to vector<1x1x128xf32>
    %56 = vector.broadcast %55 : vector<1x1x128xf32> to vector<2x1x128xf32>
    %57 = arith.mulf %56, %54 : vector<2x1x128xf32>
    %58 = vector.broadcast %57 : vector<2x1x128xf32> to vector<2x8x128xf32>
    %59 = arith.mulf %46, %58 : vector<2x8x128xf32>
    %60 = vector.shape_cast %4 : vector<1x128xf32> to vector<1x1x128xf32>
    %61 = vector.broadcast %60 : vector<1x1x128xf32> to vector<2x8x128xf32>
    %62 = arith.addf %59, %61 : vector<2x8x128xf32>
    %cst_20 = arith.constant 0.000000e+00 : f32
    %63 = vector.broadcast %cst_20 : f32 to vector<2x8x128xf32>
    %64 = arith.maximumf %62, %63 : vector<2x8x128xf32>
    %65 = arith.addf %64, %11 : vector<2x8x128xf32>
    %cst_21 = arith.constant dense<0.000000e+00> : vector<2x128xf32>
    %66 = vector.multi_reduction <add>, %65, %cst_21 [1] : vector<2x8x128xf32> to vector<2x128xf32>
    %67 = vector.shape_cast %66 : vector<2x128xf32> to vector<2x1x128xf32>
    %cst_22 = arith.constant 1.250000e-01 : f32
    %68 = vector.broadcast %cst_22 : f32 to vector<2x1x128xf32>
    %69 = arith.mulf %67, %68 : vector<2x1x128xf32>
    %70 = vector.broadcast %69 : vector<2x1x128xf32> to vector<2x8x128xf32>
    %71 = arith.subf %65, %70 : vector<2x8x128xf32>
    %72 = arith.mulf %71, %71 : vector<2x8x128xf32>
    %cst_23 = arith.constant dense<0.000000e+00> : vector<2x128xf32>
    %73 = vector.multi_reduction <add>, %72, %cst_23 [1] : vector<2x8x128xf32> to vector<2x128xf32>
    %74 = vector.shape_cast %73 : vector<2x128xf32> to vector<2x1x128xf32>
    %cst_24 = arith.constant 1.250000e-01 : f32
    %75 = vector.broadcast %cst_24 : f32 to vector<2x1x128xf32>
    %76 = arith.mulf %74, %75 : vector<2x1x128xf32>
    %cst_25 = arith.constant 9.99999974E-6 : f32
    %77 = vector.broadcast %cst_25 : f32 to vector<2x1x128xf32>
    %78 = arith.addf %76, %77 : vector<2x1x128xf32>
    %79 = math.rsqrt %78 : vector<2x1x128xf32>
    %80 = vector.shape_cast %5 : vector<1x128xf32> to vector<1x1x128xf32>
    %81 = vector.broadcast %80 : vector<1x1x128xf32> to vector<2x1x128xf32>
    %82 = arith.mulf %81, %79 : vector<2x1x128xf32>
    %83 = vector.broadcast %82 : vector<2x1x128xf32> to vector<2x8x128xf32>
    %84 = arith.mulf %71, %83 : vector<2x8x128xf32>
    %85 = vector.shape_cast %6 : vector<1x128xf32> to vector<1x1x128xf32>
    %86 = vector.broadcast %85 : vector<1x1x128xf32> to vector<2x8x128xf32>
    %87 = arith.addf %84, %86 : vector<2x8x128xf32>
    %c0_26 = arith.constant 0 : index
    %c0_27 = arith.constant 0 : index
    %c0_28 = arith.constant 0 : index
    %88 = vector.load %arg5[%c0_26, %c0_27, %c0_28] : memref<2x8x128xf32, #tpu.memory_space<vmem>>, vector<2x8x128xf32>
    tpu.vector_store %arg5[%c0_26, %c0_27, %c0_28], %87 {strides = array<i32>} : memref<2x8x128xf32, #tpu.memory_space<vmem>>, vector<2x8x128xf32>,
    return
  }
  func.func @transform_0(%arg0: i32) -> (i32, i32, i32) {
    %c0_i32 = arith.constant 0 : i32
    %c0_i32_0 = arith.constant 0 : i32
    %c0_i32_1 = arith.constant 0 : i32
    return %arg0, %c0_i32, %c0_i32_0 : i32, i32, i32
  }
  func.func @transform_1(%arg0: i32) -> (i32, i32) {
    %c0_i32 = arith.constant 0 : i32
    %c0_i32_0 = arith.constant 0 : i32
    %c0_i32_1 = arith.constant 0 : i32
    return %c0_i32, %c0_i32_0 : i32, i32
  }
  func.func @transform_2(%arg0: i32) -> (i32, i32) {
    %c0_i32 = arith.constant 0 : i32
    %c0_i32_0 = arith.constant 0 : i32
    %c0_i32_1 = arith.constant 0 : i32
    return %c0_i32, %c0_i32_0 : i32, i32
  }
  func.func @transform_3(%arg0: i32) -> (i32, i32) {
    %c0_i32 = arith.constant 0 : i32
    %c0_i32_0 = arith.constant 0 : i32
    %c0_i32_1 = arith.constant 0 : i32
    return %c0_i32, %c0_i32_0 : i32, i32
  }
  func.func @transform_4(%arg0: i32) -> (i32, i32, i32) {
    %c0_i32 = arith.constant 0 : i32
    %c0_i32_0 = arith.constant 0 : i32
    %c0_i32_1 = arith.constant 0 : i32
    return %arg0, %c0_i32, %c0_i32_0 : i32, i32, i32
  }
}

</mosaic_0001>

<llo_original>
// kernel: tpu_custom_call.1
$region0: #{tpu_custom_call.1}
  #allocation0 [shape = 'u32[]', space=smem, size = 0x4, offset = 0x4, fixed_abs, tag = 'smem constant byte address 0x4 - core index']
  #allocation1 [shape = 'u32[72,128]{1,0:T(1,128)}', space=vmem, size = 0x9000, scoped, tag = 'internal scratch']
  %s0 = inlined_call_operand.hbm [shape: bf16[4,8,128], index: 0, kind: input, shape index: {}]
  %s1 = inlined_call_operand.hbm [shape: bf16[128,128], index: 1, kind: input, shape index: {}]
  %s2 = inlined_call_operand.hbm [shape: bf16[128,128], index: 2, kind: input, shape index: {}]
  %s3 = inlined_call_operand.hbm [shape: f32[6,128], index: 3, kind: input, shape index: {}]
  %s4 = inlined_call_operand.hbm [shape: f32[4,8,128], index: 4, kind: output, shape index: {}]
  %s5 = sld [smem:[#allocation0]]
  $region65: #{tpu_custom_call.1} parent=0
    _
  %s7 = ssub.s32 1, %s5
  %s8 = scalar_select 0, %s7, %s5
  $region1: #{tpu_custom_call.1} parent=0
    #allocation2 [shape = 'u8[8192]{0}', space=vmem, size = 0x2000, scoped, tag = 'input window, operand 0']
    #allocation3 [shape = 's32[2]{0}', space=sflag, size = 0x8, scoped, tag = 'scoped memory for tpu_custom_call.1']
    #allocation4 [shape = 's32[2]{0}', space=sflag, size = 0x8, scoped, tag = 'scoped memory for tpu_custom_call.1']
    #allocation5 [shape = 'u8[32768]{0}', space=vmem, size = 0x8000, scoped, tag = 'input window, operand 1, single buffered']
    #allocation6 [shape = 's32[1]{0}', space=sflag, size = 0x4, scoped, tag = 'scoped memory for tpu_custom_call.1']
    #allocation7 [shape = 'u8[32768]{0}', space=vmem, size = 0x8000, scoped, tag = 'input window, operand 2, single buffered']
    #allocation8 [shape = 'u8[4096]{0}', space=vmem, size = 0x1000, scoped, tag = 'input window, operand 3, single buffered']
    #allocation9 [shape = 's32[1]{0}', space=sflag, size = 0x4, scoped, tag = 'scoped memory for tpu_custom_call.1']
    #allocation10 [shape = 'u8[16384]{0}', space=vmem, size = 0x4000, scoped, tag = 'output window, operand 0']
    %9 = vsyncpa [#allocation3], 0
    %s10 = scalar_lea.sflag [#allocation3], 1
    %11 = vsyncpa %s10, 0
    %12 = vsyncpa [#allocation6], 0
    %13 = vsyncpa [#allocation9], 0
    %14 = vsyncpa [#allocation4], 0
    %s15 = scalar_lea.sflag [#allocation4], 1
    %16 = vsyncpa %s15, 0
    loop: start=0, step=1, limit=4
    $region2: #{tpu_custom_call.1} parent=1 // loop_pre_header
      _
    $region3: #{tpu_custom_call.1} parent=1 // loop_header
      %s18 = sphi 0, %s22
      %p19 = scmp.ge.s32.totalorder %s18, 4
      %s28 = sphi 0, %s30
      %s31 = sphi 0, %s28
      %s32 = sphi 0, %s31
      %s48 = sphi 0, %s32
      %s52 = sphi 0, %s52
      %s54 = sphi 0, %s52
      %s55 = sphi 0, %s54
      %s69 = sphi 0, %s55
      %s73 = sphi 0, %s73
      %s75 = sphi 0, %s73
      %s76 = sphi 0, %s75
      %s90 = sphi 0, %s76
      %s94 = sphi 0, %s94
      %s96 = sphi 0, %s94
      %s97 = sphi 0, %s96
      %s111 = sphi 0, %s97
      %s117 = sphi 0, %s119
      %s120 = sphi 0, %s117
      %s121 = sphi 0, %s120
      %s137 = sphi 0, %s121
    $region4: #{tpu_custom_call.1} parent=1 // loop_header_branch
      %21 = sbr.rel (%p19) target = $region8
    $region5: #{tpu_custom_call.1} parent=1 // loop_body
      %s23 = ssub.s32 %s18, 1
      %s24 = ssub.s32 %s18, 2
      %s25 = sadd.s32 %s18, 1
      %s26 = ssub.s32 %s18, %s25
      %p27 = scmp.eq.s32.totalorder %s26, 0
      %s29 = sadd.s32 %s28, 1
      %s30 = scalar_select %p27, %s28, %s29
      %p33 = pneg %p27
      %p34 = scmp.eq.s32.totalorder %s18, 1
      %p35 = por %p33, %p34
      %p36 = scmp.ne.s32.totalorder %s28, %s31
      %p37 = scmp.eq.s32.totalorder %s18, 0
      %p38 = por %p36, %p37
      %p39 = scmp.ne.s32.totalorder %s28, %s31
      %p40 = scmp.eq.s32.totalorder %s23, 1
      %p41 = por %p39, %p40
      %p42 = scmp.ne.s32.totalorder %s31, %s32
      %p43 = scmp.eq.s32.totalorder %s23, 0
      %p44 = por %p42, %p43
      %p45 = scmp.ne.s32.totalorder %s31, %s32
      %p46 = scmp.eq.s32.totalorder %s24, 1
      %p47 = por %p45, %p46
      %p49 = scmp.ne.s32.totalorder %s32, %s48
      %p50 = scmp.eq.s32.totalorder %s24, 0
      %p51 = por %p49, %p50
      %s53 = sadd.s32 %s52, 1
      %p56 = scmp.eq.s32.totalorder %s18, 1
      %p57 = scmp.ne.s32.totalorder %s52, %s54
      %p58 = scmp.eq.s32.totalorder %s18, 0
      %p59 = por %p57, %p58
      %p60 = scmp.ne.s32.totalorder %s52, %s54
      %p61 = scmp.eq.s32.totalorder %s23, 1
      %p62 = por %p60, %p61
      %p63 = scmp.ne.s32.totalorder %s54, %s55
      %p64 = scmp.eq.s32.totalorder %s23, 0
      %p65 = por %p63, %p64
      %p66 = scmp.ne.s32.totalorder %s54, %s55
      %p67 = scmp.eq.s32.totalorder %s24, 1
      %p68 = por %p66, %p67
      %p70 = scmp.ne.s32.totalorder %s55, %s69
      %p71 = scmp.eq.s32.totalorder %s24, 0
      %p72 = por %p70, %p71
      %s74 = sadd.s32 %s73, 1
      %p77 = scmp.eq.s32.totalorder %s18, 1
      %p78 = scmp.ne.s32.totalorder %s73, %s75
      %p79 = scmp.eq.s32.totalorder %s18, 0
      %p80 = por %p78, %p79
      %p81 = scmp.ne.s32.totalorder %s73, %s75
      %p82 = scmp.eq.s32.totalorder %s23, 1
      %p83 = por %p81, %p82
      %p84 = scmp.ne.s32.totalorder %s75, %s76
      %p85 = scmp.eq.s32.totalorder %s23, 0
      %p86 = por %p84, %p85
      %p87 = scmp.ne.s32.totalorder %s75, %s76
      %p88 = scmp.eq.s32.totalorder %s24, 1
      %p89 = por %p87, %p88
      %p91 = scmp.ne.s32.totalorder %s76, %s90
      %p92 = scmp.eq.s32.totalorder %s24, 0
      %p93 = por %p91, %p92
      %s95 = sadd.s32 %s94, 1
      %p98 = scmp.eq.s32.totalorder %s18, 1
      %p99 = scmp.ne.s32.totalorder %s94, %s96
      %p100 = scmp.eq.s32.totalorder %s18, 0
      %p101 = por %p99, %p100
      %p102 = scmp.ne.s32.totalorder %s94, %s96
      %p103 = scmp.eq.s32.totalorder %s23, 1
      %p104 = por %p102, %p103
      %p105 = scmp.ne.s32.totalorder %s96, %s97
      %p106 = scmp.eq.s32.totalorder %s23, 0
      %p107 = por %p105, %p106
      %p108 = scmp.ne.s32.totalorder %s96, %s97
      %p109 = scmp.eq.s32.totalorder %s24, 1
      %p110 = por %p108, %p109
      %p112 = scmp.ne.s32.totalorder %s97, %s111
      %p113 = scmp.eq.s32.totalorder %s24, 0
      %p114 = por %p112, %p113
      %s115 = ssub.s32 %s18, %s25
      %p116 = scmp.eq.s32.totalorder %s115, 0
      %s118 = sadd.s32 %s117, 1
      %s119 = scalar_select %p116, %s117, %s118
      %p122 = pneg %p116
      %p123 = scmp.eq.s32.totalorder %s18, 1
      %p124 = por %p122, %p123
      %p125 = scmp.ne.s32.totalorder %s117, %s120
      %p126 = scmp.eq.s32.totalorder %s18, 0
      %p127 = por %p125, %p126
      %p128 = scmp.ne.s32.totalorder %s117, %s120
      %p129 = scmp.eq.s32.totalorder %s23, 1
      %p130 = por %p128, %p129
      %p131 = scmp.ne.s32.totalorder %s120, %s121
      %p132 = scmp.eq.s32.totalorder %s23, 0
      %p133 = por %p131, %p132
      %p134 = scmp.ne.s32.totalorder %s120, %s121
      %p135 = scmp.eq.s32.totalorder %s24, 1
      %p136 = por %p134, %p135
      %p138 = scmp.ne.s32.totalorder %s121, %s137
      %p139 = scmp.eq.s32.totalorder %s24, 0
      %p140 = por %p138, %p139
      %p141 = scmp.le.s32.totalorder 1, %s18
      %p142 = scmp.lt.s32.totalorder %s18, 3
      %p143 = pnand %p141, %p142
      %p144 = pneg %p143
      // Predicated region
      $region9: #{tpu_custom_call.1} parent=5 // pred_check
        _
      $region10: #{tpu_custom_call.1} parent=5 // pred_check_branch
        %146 = sbr.rel (%p143) target = $region12
      $region11: #{tpu_custom_call.1} parent=5 // pred_region
        %s147 = ssub.s32 %s18, 1
        // Predicated region
        $region13: #{tpu_custom_call.1} parent=11 // pred_check
          %p148 = pneg %p65
        $region14: #{tpu_custom_call.1} parent=11 // pred_check_branch
          %150 = sbr.rel (%p148) target = $region16
        $region15: #{tpu_custom_call.1} parent=11 // pred_region
          %152 = vsyncadd [#allocation6], 0
          %s153 = sshll.u32 %s1, 4
          %s154 = int_to_ptr.hbm [resolvable:$true] %s153
          %s155 = sshll.u32 [#allocation5], 4
          %s156 = int_to_ptr.vmem [resolvable:$true] %s155
          %161 = dma.hbm_to_vmem [thread:$0]  %s154, 1024, %s156, [#allocation6], 64, 64, 4
        $region16: #{tpu_custom_call.1} parent=11 // pred_fallthru
          _
        // Predicated region
        $region17: #{tpu_custom_call.1} parent=11 // pred_check
          %p162 = pneg %p86
        $region18: #{tpu_custom_call.1} parent=11 // pred_check_branch
          %164 = sbr.rel (%p162) target = $region20
        $region19: #{tpu_custom_call.1} parent=11 // pred_region
          %166 = vsyncadd [#allocation6], 0
          %s167 = sshll.u32 %s2, 4
          %s168 = int_to_ptr.hbm [resolvable:$true] %s167
          %s169 = sshll.u32 [#allocation7], 4
          %s170 = int_to_ptr.vmem [resolvable:$true] %s169
          %175 = dma.hbm_to_vmem [thread:$0]  %s168, 1024, %s170, [#allocation6], 64, 64, 4
        $region20: #{tpu_custom_call.1} parent=11 // pred_fallthru
          _
        // Predicated region
        $region21: #{tpu_custom_call.1} parent=11 // pred_check
          %p176 = pneg %p107
        $region22: #{tpu_custom_call.1} parent=11 // pred_check_branch
          %178 = sbr.rel (%p176) target = $region24
        $region23: #{tpu_custom_call.1} parent=11 // pred_region
          %180 = vsyncadd [#allocation9], 0
          %s182 = sshll.u32 %s3, 4
          %s183 = int_to_ptr.hbm [resolvable:$true] %s182
          %s184 = sshll.u32 [#allocation8], 4
          %s185 = int_to_ptr.vmem [resolvable:$true] %s184
          %187 = dma.hbm_to_vmem [thread:$0]  %s183, 128, %s185, [#allocation9]
        $region24: #{tpu_custom_call.1} parent=11 // pred_fallthru
          _
      $region12: #{tpu_custom_call.1} parent=5 // pred_fallthru
        _
      %p188 = scmp.lt.s32.totalorder %s18, 2
      // Predicated region
      $region25: #{tpu_custom_call.1} parent=5 // pred_check
        %p189 = pneg %p188
      $region26: #{tpu_custom_call.1} parent=5 // pred_check_branch
        %191 = sbr.rel (%p189) target = $region28
      $region27: #{tpu_custom_call.1} parent=5 // pred_region
        // Predicated region
        $region29: #{tpu_custom_call.1} parent=27 // pred_check
          %p192 = pneg %p38
        $region30: #{tpu_custom_call.1} parent=27 // pred_check_branch
          %194 = sbr.rel (%p192) target = $region32
        $region31: #{tpu_custom_call.1} parent=27 // pred_region
          %s195 = sand.u32 %s28, 1
          %s196 = scalar_lea.sflag [#allocation3], %s195
          %s197 = sand.u32 %s28, 1
          %s198 = smul.addr %s197, 8
          %s199 = scalar_lea.vmem [#allocation2], %s198
          %s200 = smul.u32 2, %s18
          %202 = vsyncadd %s196, 0
          %s203 = smul.addr %s200, 4
          %s204 = scalar_lea.hbm %s0, %s203
          %s205 = sshll.u32 %s204, 4
          %s206 = int_to_ptr.hbm [resolvable:$true] %s205
          %s207 = sshll.u32 %s199, 4
          %s208 = int_to_ptr.vmem [resolvable:$true] %s207
          %213 = dma.hbm_to_vmem [thread:$0]  %s206, 128, %s208, %s196, 64, 64, 4
        $region32: #{tpu_custom_call.1} parent=27 // pred_fallthru
          _
      $region28: #{tpu_custom_call.1} parent=5 // pred_fallthru
        _
      %p214 = scmp.le.s32.totalorder 1, %s18
      %p215 = scmp.lt.s32.totalorder %s18, 3
      %p216 = pnand %p214, %p215
      %p217 = pneg %p216
      // Predicated region
      $region33: #{tpu_custom_call.1} parent=5 // pred_check
        _
      $region34: #{tpu_custom_call.1} parent=5 // pred_check_branch
        %219 = sbr.rel (%p216) target = $region36
      $region35: #{tpu_custom_call.1} parent=5 // pred_region
        %s220 = ssub.s32 %s18, 1
        %s221 = sand.u32 %s31, 1
        %s222 = scalar_lea.sflag [#allocation3], %s221
        %s223 = sand.u32 %s31, 1
        %s224 = smul.addr %s223, 8
        %s225 = scalar_lea.vmem [#allocation2], %s224
        // Predicated region
        $region37: #{tpu_custom_call.1} parent=35 // pred_check
          %p226 = pneg %p44
        $region38: #{tpu_custom_call.1} parent=35 // pred_check_branch
          %228 = sbr.rel (%p226) target = $region40
        $region39: #{tpu_custom_call.1} parent=35 // pred_region
          %230 = dma.done %s222, 128
        $region40: #{tpu_custom_call.1} parent=35 // pred_fallthru
          _
        // Predicated region
        $region41: #{tpu_custom_call.1} parent=35 // pred_check
          %p231 = pneg %p65
        $region42: #{tpu_custom_call.1} parent=35 // pred_check_branch
          %233 = sbr.rel (%p231) target = $region44
        $region43: #{tpu_custom_call.1} parent=35 // pred_region
          %235 = dma.done [#allocation6], 1024
        $region44: #{tpu_custom_call.1} parent=35 // pred_fallthru
          _
        // Predicated region
        $region45: #{tpu_custom_call.1} parent=35 // pred_check
          %p236 = pneg %p86
        $region46: #{tpu_custom_call.1} parent=35 // pred_check_branch
          %238 = sbr.rel (%p236) target = $region48
        $region47: #{tpu_custom_call.1} parent=35 // pred_region
          %240 = dma.done [#allocation6], 1024
        $region48: #{tpu_custom_call.1} parent=35 // pred_fallthru
          _
        // Predicated region
        $region49: #{tpu_custom_call.1} parent=35 // pred_check
          %p241 = pneg %p107
        $region50: #{tpu_custom_call.1} parent=35 // pred_check_branch
          %243 = sbr.rel (%p241) target = $region52
        $region51: #{tpu_custom_call.1} parent=35 // pred_region
          %245 = dma.done [#allocation9], 128
        $region52: #{tpu_custom_call.1} parent=35 // pred_fallthru
          _
        %s246 = sand.u32 %s31, 1
        %s247 = scalar_lea.sflag [#allocation3], %s246
        %s248 = sand.u32 %s31, 1
        %s249 = smul.addr %s248, 8
        %s250 = scalar_lea.vmem [#allocation2], %s249
        %p251 = pneg %p44
        %p252 = pneg %p41
        %p253 = pneg %p65
        %p254 = pneg %p62
        %p255 = pneg %p86
        %p256 = pneg %p83
        %p257 = pneg %p107
        %p258 = pneg %p104
        %p259 = pneg %p133
        %p260 = pneg %p130
        %s261 = sand.u32 %s120, 1
        %s262 = scalar_lea.sflag [#allocation4], %s261
        %s263 = sand.u32 %s120, 1
        %s264 = smul.addr %s263, 16
        %s265 = scalar_lea.vmem [#allocation10], %s264
        %s266 = smul.u32 2, %s23
        %s267 = smul.u32 2, %s23
        %v268 = vld [vmem:[#allocation8] sm:$0x3f]
        %v269 = vld [vmem:[%s225] sm:$0xf]
        %v270 = vld [vmem:[%s225 + $0x4] sm:$0xf]
        %v271 = vld [vmem:[#allocation5] sm:$0xf]
        %v272 = vld [vmem:[#allocation5 + $0x4] sm:$0xf]
        %v273 = vld [vmem:[#allocation5 + $0x8] sm:$0xf]
        %v274 = vld [vmem:[#allocation5 + $0xc] sm:$0xf]
        %v275 = vld [vmem:[#allocation5 + $0x10] sm:$0xf]
        %v276 = vld [vmem:[#allocation5 + $0x14] sm:$0xf]
        %v277 = vld [vmem:[#allocation5 + $0x18] sm:$0xf]
        %v278 = vld [vmem:[#allocation5 + $0x1c] sm:$0xf]
        %v279 = vld [vmem:[#allocation5 + $0x20] sm:$0xf]
        %v280 = vld [vmem:[#allocation5 + $0x24] sm:$0xf]
        %v281 = vld [vmem:[#allocation5 + $0x28] sm:$0xf]
        %v282 = vld [vmem:[#allocation5 + $0x2c] sm:$0xf]
        %v283 = vld [vmem:[#allocation5 + $0x30] sm:$0xf]
        %v284 = vld [vmem:[#allocation5 + $0x34] sm:$0xf]
        %v285 = vld [vmem:[#allocation5 + $0x38] sm:$0xf]
        %v286 = vld [vmem:[#allocation5 + $0x3c] sm:$0xf]
        %v289 = vunpack.c.l.b16 %v269
        %v290 = vunpack.c.l.b16 %v270
        %v291 = vpack.c.b16 %v290, %v289
        %v309 = vunpack.c.l.b16 %v271
        %v310 = vunpack.c.l.b16 %v272
        %v311 = vunpack.c.l.b16 %v273
        %v312 = vunpack.c.l.b16 %v274
        %v313 = vunpack.c.l.b16 %v275
        %v314 = vunpack.c.l.b16 %v276
        %v315 = vunpack.c.l.b16 %v277
        %v316 = vunpack.c.l.b16 %v278
        %v317 = vunpack.c.l.b16 %v279
        %v318 = vunpack.c.l.b16 %v280
        %v319 = vunpack.c.l.b16 %v281
        %v320 = vunpack.c.l.b16 %v282
        %v321 = vunpack.c.l.b16 %v283
        %v322 = vunpack.c.l.b16 %v284
        %v323 = vunpack.c.l.b16 %v285
        %v324 = vunpack.c.l.b16 %v286
        %v325 = vpack.c.b16 %v310, %v309
        %v326 = vpack.c.b16 %v312, %v311
        %v327 = vpack.c.b16 %v314, %v313
        %v328 = vpack.c.b16 %v316, %v315
        %v329 = vpack.c.b16 %v318, %v317
        %v330 = vpack.c.b16 %v320, %v319
        %v331 = vpack.c.b16 %v322, %v321
        %v332 = vpack.c.b16 %v324, %v323
        %341 = vmatpush.bf16.msra.mxu0 %v332
        %342 = vmatpush.bf16.msra.mxu0 %v331
        %343 = vmatpush.bf16.msra.mxu0 %v330
        %344 = vmatpush.bf16.msra.mxu0 %v329
        %345 = vmatpush.bf16.msra.mxu0 %v328
        %346 = vmatpush.bf16.msra.mxu0 %v327
        %347 = vmatpush.bf16.msra.mxu0 %v326
        %348 = vmatpush.bf16.msra.mxu0 %v325
        %349 = vmatmul.bf16.gmra.mxu0 %v291
        %v350 = vpop.f32.mrf.mxu0
        %v351 = vadd.f32 0.0, %v350
        %v352 = vpop.f32.mrf.mxu0
        %v353 = vadd.f32 0.0, %v352
        %354 = vdwg.mxu0
        %v355 = vrot.slane %v351, 4
        %v356 = vadd.f32 %v351, %v355
        %v357 = vrot.slane %v356, 2
        %v358 = vadd.f32 %v356, %v357
        %v359 = vrot.slane %v358, 1
        %v360 = vadd.f32 %v358, %v359
        %v361 = vrot.slane %v353, 4
        %v362 = vadd.f32 %v353, %v361
        %v363 = vrot.slane %v362, 2
        %v364 = vadd.f32 %v362, %v363
        %v365 = vrot.slane %v364, 1
        %v366 = vadd.f32 %v364, %v365
        %v367 = vmul.f32 %v360, 0.125
        %v368 = vmul.f32 %v366, 0.125
        %v369 = vsub.f32 %v351, %v367
        %v370 = vsub.f32 %v353, %v368
        %v371 = vmul.f32 %v369, %v369
        %v372 = vmul.f32 %v370, %v370
        %v373 = vrot.slane %v371, 4
        %v374 = vadd.f32 %v371, %v373
        %v375 = vrot.slane %v374, 2
        %v376 = vadd.f32 %v374, %v375
        %v377 = vrot.slane %v376, 1
        %v378 = vadd.f32 %v376, %v377
        %v379 = vrot.slane %v372, 4
        %v380 = vadd.f32 %v372, %v379
        %v381 = vrot.slane %v380, 2
        %v382 = vadd.f32 %v380, %v381
        %v383 = vrot.slane %v382, 1
        %v384 = vadd.f32 %v382, %v383
        %v385 = vmul.f32 %v378, 0.125
        %v386 = vmul.f32 %v384, 0.125
        %v387 = vadd.f32 %v385, 1e-05
        %v388 = vadd.f32 %v386, 1e-05
        %v389 = vrsqrt.pop %v387
        %v390 = vmul.f32 %v389, %v387
        %v391 = vmul.f32 %v390, %v389
        %v392 = vmul.f32 0.5, %v391
        %v393 = vsub.f32 1.5, %v392
        %v394 = vmul.f32 %v389, %v393
        %vm395 = vweird.f32 %v387
        %vm396 = vweird.f32 %v389
        %vm397 = vmor %vm395, %vm396
        %v398 = vsel %vm397, %v389, %v394
        %v399 = vrsqrt.pop %v388
        %v400 = vmul.f32 %v399, %v388
        %v401 = vmul.f32 %v400, %v399
        %v402 = vmul.f32 0.5, %v401
        %v403 = vsub.f32 1.5, %v402
        %v404 = vmul.f32 %v399, %v403
        %vm405 = vweird.f32 %v388
        %vm406 = vweird.f32 %v399
        %vm407 = vmor %vm405, %vm406
        %v408 = vsel %vm407, %v399, %v404
        %v409 = vmul.f32 %v268, %v398
        %v410 = vmul.f32 %v268, %v408
        %v411 = vperm.slane %v409, 0
        %v412 = vperm.slane %v410, 0
        %v413 = vmul.f32 %v369, %v411
        %v414 = vmul.f32 %v370, %v412
        %v415 = vperm.slane %v268, 1
        %v416 = vadd.f32 %v413, %v415
        %v417 = vadd.f32 %v414, %v415
        %v418 = vmax.f32 %v416, 0.0
        %v419 = vmax.f32 %v417, 0.0
        %v420 = vpack.c.bf16 %v419, %v418
        %v421 = vld [vmem:[#allocation7] sm:$0xf]
        %v422 = vld [vmem:[#allocation7 + $0x4] sm:$0xf]
        %v423 = vld [vmem:[#allocation7 + $0x8] sm:$0xf]
        %v424 = vld [vmem:[#allocation7 + $0xc] sm:$0xf]
        %v425 = vld [vmem:[#allocation7 + $0x10] sm:$0xf]
        %v426 = vld [vmem:[#allocation7 + $0x14] sm:$0xf]
        %v427 = vld [vmem:[#allocation7 + $0x18] sm:$0xf]
        %v428 = vld [vmem:[#allocation7 + $0x1c] sm:$0xf]
        %v429 = vld [vmem:[#allocation7 + $0x20] sm:$0xf]
        %v430 = vld [vmem:[#allocation7 + $0x24] sm:$0xf]
        %v431 = vld [vmem:[#allocation7 + $0x28] sm:$0xf]
        %v432 = vld [vmem:[#allocation7 + $0x2c] sm:$0xf]
        %v433 = vld [vmem:[#allocation7 + $0x30] sm:$0xf]
        %v434 = vld [vmem:[#allocation7 + $0x34] sm:$0xf]
        %v435 = vld [vmem:[#allocation7 + $0x38] sm:$0xf]
        %v436 = vld [vmem:[#allocation7 + $0x3c] sm:$0xf]
        %v453 = vunpack.c.l.b16 %v421
        %v454 = vunpack.c.l.b16 %v422
        %v455 = vunpack.c.l.b16 %v423
        %v456 = vunpack.c.l.b16 %v424
        %v457 = vunpack.c.l.b16 %v425
        %v458 = vunpack.c.l.b16 %v426
        %v459 = vunpack.c.l.b16 %v427
        %v460 = vunpack.c.l.b16 %v428
        %v461 = vunpack.c.l.b16 %v429
        %v462 = vunpack.c.l.b16 %v430
        %v463 = vunpack.c.l.b16 %v431
        %v464 = vunpack.c.l.b16 %v432
        %v465 = vunpack.c.l.b16 %v433
        %v466 = vunpack.c.l.b16 %v434
        %v467 = vunpack.c.l.b16 %v435
        %v468 = vunpack.c.l.b16 %v436
        %v469 = vpack.c.b16 %v454, %v453
        %v470 = vpack.c.b16 %v456, %v455
        %v471 = vpack.c.b16 %v458, %v457
        %v472 = vpack.c.b16 %v460, %v459
        %v473 = vpack.c.b16 %v462, %v461
        %v474 = vpack.c.b16 %v464, %v463
        %v475 = vpack.c.b16 %v466, %v465
        %v476 = vpack.c.b16 %v468, %v467
        %485 = vmatpush.bf16.msra.mxu0 %v476
        %486 = vmatpush.bf16.msra.mxu0 %v475
        %487 = vmatpush.bf16.msra.mxu0 %v474
        %488 = vmatpush.bf16.msra.mxu0 %v473
        %489 = vmatpush.bf16.msra.mxu0 %v472
        %490 = vmatpush.bf16.msra.mxu0 %v471
        %491 = vmatpush.bf16.msra.mxu0 %v470
        %492 = vmatpush.bf16.msra.mxu0 %v469
        %493 = vmatmul.bf16.gmra.mxu0 %v420
        %v494 = vpop.f32.mrf.mxu0
        %v495 = vadd.f32 0.0, %v494
        %v496 = vpop.f32.mrf.mxu0
        %v497 = vadd.f32 0.0, %v496
        %498 = vdwg.mxu0
        %v499 = vrot.slane %v495, 4
        %v500 = vadd.f32 %v495, %v499
        %v501 = vrot.slane %v500, 2
        %v502 = vadd.f32 %v500, %v501
        %v503 = vrot.slane %v502, 1
        %v504 = vadd.f32 %v502, %v503
        %v505 = vrot.slane %v497, 4
        %v506 = vadd.f32 %v497, %v505
        %v507 = vrot.slane %v506, 2
        %v508 = vadd.f32 %v506, %v507
        %v509 = vrot.slane %v508, 1
        %v510 = vadd.f32 %v508, %v509
        %v511 = vmul.f32 %v504, 0.125
        %v512 = vmul.f32 %v510, 0.125
        %v513 = vsub.f32 %v495, %v511
        %v514 = vsub.f32 %v497, %v512
        %v515 = vmul.f32 %v513, %v513
        %v516 = vmul.f32 %v514, %v514
        %v517 = vrot.slane %v515, 4
        %v518 = vadd.f32 %v515, %v517
        %v519 = vrot.slane %v518, 2
        %v520 = vadd.f32 %v518, %v519
        %v521 = vrot.slane %v520, 1
        %v522 = vadd.f32 %v520, %v521
        %v523 = vrot.slane %v516, 4
        %v524 = vadd.f32 %v516, %v523
        %v525 = vrot.slane %v524, 2
        %v526 = vadd.f32 %v524, %v525
        %v527 = vrot.slane %v526, 1
        %v528 = vadd.f32 %v526, %v527
        %v529 = vmul.f32 %v522, 0.125
        %v530 = vmul.f32 %v528, 0.125
        %v531 = vadd.f32 %v529, 1e-05
        %v532 = vadd.f32 %v530, 1e-05
        %v533 = vrsqrt.pop %v531
        %v534 = vmul.f32 %v533, %v531
        %v535 = vmul.f32 %v534, %v533
        %v536 = vmul.f32 0.5, %v535
        %v537 = vsub.f32 1.5, %v536
        %v538 = vmul.f32 %v533, %v537
        %vm539 = vweird.f32 %v531
        %vm540 = vweird.f32 %v533
        %vm541 = vmor %vm539, %vm540
        %v542 = vsel %vm541, %v533, %v538
        %v543 = vrsqrt.pop %v532
        %v544 = vmul.f32 %v543, %v532
        %v545 = vmul.f32 %v544, %v543
        %v546 = vmul.f32 0.5, %v545
        %v547 = vsub.f32 1.5, %v546
        %v548 = vmul.f32 %v543, %v547
        %vm549 = vweird.f32 %v532
        %vm550 = vweird.f32 %v543
        %vm551 = vmor %vm549, %vm550
        %v552 = vsel %vm551, %v543, %v548
        %v553 = vmul.f32 %v268, %v542
        %v554 = vmul.f32 %v268, %v552
        %v555 = vperm.slane %v553, 2
        %v556 = vperm.slane %v554, 2
        %v557 = vmul.f32 %v513, %v555
        %v558 = vmul.f32 %v514, %v556
        %v559 = vperm.slane %v268, 3
        %v560 = vadd.f32 %v557, %v559
        %v561 = vadd.f32 %v558, %v559
        %v562 = vmax.f32 %v560, 0.0
        %v563 = vmax.f32 %v561, 0.0
        %v564 = vadd.f32 %v562, %v351
        %v565 = vadd.f32 %v563, %v353
        %v566 = vrot.slane %v564, 4
        %v567 = vadd.f32 %v564, %v566
        %v568 = vrot.slane %v567, 2
        %v569 = vadd.f32 %v567, %v568
        %v570 = vrot.slane %v569, 1
        %v571 = vadd.f32 %v569, %v570
        %v572 = vrot.slane %v565, 4
        %v573 = vadd.f32 %v565, %v572
        %v574 = vrot.slane %v573, 2
        %v575 = vadd.f32 %v573, %v574
        %v576 = vrot.slane %v575, 1
        %v577 = vadd.f32 %v575, %v576
        %v578 = vmul.f32 %v571, 0.125
        %v579 = vmul.f32 %v577, 0.125
        %v580 = vsub.f32 %v564, %v578
        %v581 = vsub.f32 %v565, %v579
        %v582 = vmul.f32 %v580, %v580
        %v583 = vmul.f32 %v581, %v581
        %v584 = vrot.slane %v582, 4
        %v585 = vadd.f32 %v582, %v584
        %v586 = vrot.slane %v585, 2
        %v587 = vadd.f32 %v585, %v586
        %v588 = vrot.slane %v587, 1
        %v589 = vadd.f32 %v587, %v588
        %v590 = vrot.slane %v583, 4
        %v591 = vadd.f32 %v583, %v590
        %v592 = vrot.slane %v591, 2
        %v593 = vadd.f32 %v591, %v592
        %v594 = vrot.slane %v593, 1
        %v595 = vadd.f32 %v593, %v594
        %v596 = vmul.f32 %v589, 0.125
        %v597 = vmul.f32 %v595, 0.125
        %v598 = vadd.f32 %v596, 1e-05
        %v599 = vadd.f32 %v597, 1e-05
        %v600 = vrsqrt.pop %v598
        %v601 = vmul.f32 %v600, %v598
        %v602 = vmul.f32 %v601, %v600
        %v603 = vmul.f32 0.5, %v602
        %v604 = vsub.f32 1.5, %v603
        %v605 = vmul.f32 %v600, %v604
        %vm606 = vweird.f32 %v598
        %vm607 = vweird.f32 %v600
        %vm608 = vmor %vm606, %vm607
        %v609 = vsel %vm608, %v600, %v605
        %v610 = vrsqrt.pop %v599
        %v611 = vmul.f32 %v610, %v599
        %v612 = vmul.f32 %v611, %v610
        %v613 = vmul.f32 0.5, %v612
        %v614 = vsub.f32 1.5, %v613
        %v615 = vmul.f32 %v610, %v614
        %vm616 = vweird.f32 %v599
        %vm617 = vweird.f32 %v610
        %vm618 = vmor %vm616, %vm617
        %v619 = vsel %vm618, %v610, %v615
        %v620 = vmul.f32 %v268, %v609
        %v621 = vmul.f32 %v268, %v619
        %v622 = vperm.slane %v620, 4
        %v623 = vperm.slane %v621, 4
        %v624 = vmul.f32 %v580, %v622
        %v625 = vmul.f32 %v581, %v623
        %v626 = vperm.slane %v268, 5
        %v627 = vadd.f32 %v624, %v626
        %v628 = vadd.f32 %v625, %v626
        %629 = vst [vmem:[%s265] sm:$0xff] %v627
        %630 = vst [vmem:[%s265 + $0x8] sm:$0xff] %v628
        %s631 = sand.u32 %s120, 1
        %s632 = scalar_lea.sflag [#allocation4], %s631
        %s633 = sand.u32 %s120, 1
        %s634 = smul.addr %s633, 16
        %s635 = scalar_lea.vmem [#allocation10], %s634
        // Predicated region
        $region53: #{tpu_custom_call.1} parent=35 // pred_check
          %p636 = pneg %p130
        $region54: #{tpu_custom_call.1} parent=35 // pred_check_branch
          %638 = sbr.rel (%p636) target = $region56
        $region55: #{tpu_custom_call.1} parent=35 // pred_region
          %s639 = smul.u32 2, %s23
          %641 = vsyncadd %s632, 0
          %s642 = smul.addr %s639, 8
          %s643 = scalar_lea.hbm %s4, %s642
          %s644 = sshll.u32 %s635, 4
          %s645 = int_to_ptr.vmem [resolvable:$true] %s644
          %s646 = sshll.u32 %s643, 4
          %s647 = int_to_ptr.hbm [resolvable:$true] %s646
          %652 = dma.vmem_to_hbm [thread:$0]  %s645, 256, %s647, %s632, 128, 128, 8
        $region56: #{tpu_custom_call.1} parent=35 // pred_fallthru
          _
      $region36: #{tpu_custom_call.1} parent=5 // pred_fallthru
        _
      %p653 = scmp.le.s32.totalorder 2, %s18
      // Predicated region
      $region57: #{tpu_custom_call.1} parent=5 // pred_check
        %p654 = pneg %p653
      $region58: #{tpu_custom_call.1} parent=5 // pred_check_branch
        %656 = sbr.rel (%p654) target = $region60
      $region59: #{tpu_custom_call.1} parent=5 // pred_region
        %s657 = ssub.s32 %s18, 2
        // Predicated region
        $region61: #{tpu_custom_call.1} parent=59 // pred_check
          %p658 = pneg %p136
        $region62: #{tpu_custom_call.1} parent=59 // pred_check_branch
          %660 = sbr.rel (%p658) target = $region64
        $region63: #{tpu_custom_call.1} parent=59 // pred_region
          %s661 = sand.u32 %s121, 1
          %s662 = scalar_lea.sflag [#allocation4], %s661
          %s663 = sand.u32 %s121, 1
          %s664 = smul.addr %s663, 16
          %s665 = scalar_lea.vmem [#allocation10], %s664
          %667 = dma.done %s662, 256
        $region64: #{tpu_custom_call.1} parent=59 // pred_fallthru
          _
      $region60: #{tpu_custom_call.1} parent=5 // pred_fallthru
        _
    $region6: #{tpu_custom_call.1} parent=1 // loop_footer
      %s22 = sadd.s32 1, %s18
    $region7: #{tpu_custom_call.1} parent=1 // loop_footer_branch
      %17 = sbr.rel target = $region3
    $region8: #{tpu_custom_call.1} parent=1 // loop_exit
      _
    %668 = vsyncpa [#allocation3], 1
    %s669 = scalar_lea.sflag [#allocation3], 1
    %670 = vsyncpa %s669, 1
    %671 = vsyncpa [#allocation6], 1
    %672 = vsyncpa [#allocation9], 1
    %673 = vsyncpa [#allocation4], 1
    %s674 = scalar_lea.sflag [#allocation4], 1
    %675 = vsyncpa %s674, 1

</llo_original>
